<compile_context>
chip_gen: v5e
topology: v5e:2x2
jax: 0.10.0
libtpu: 0.0.40
codegen_flags: <defaults>
</compile_context>

<pallas_src>
import jax
import jax.numpy as jnp
from jax.experimental import pallas as pl
from jax.experimental.pallas import tpu as pltpu


def _round_up(x, m):
    return ((x + m - 1) // m) * m


def _cdiv(a, b):
    return -(-a // b)


def _vmem_capacity_bytes():
    try:
        info = pltpu.get_tpu_info()
        cap = getattr(info, "vmem_capacity_bytes", None)
        if cap:
            return int(cap)
    except Exception:
        pass
    return 64 * 1024 * 1024  # conservative: v7x per-TensorCore VMEM


def _num_tensorcores():
    try:
        info = pltpu.get_tpu_info()
        for name in ("num_cores", "core_count", "tensorcore_count", "num_tensorcores"):
            v = getattr(info, name, None)
            if v:
                return int(v)
    except Exception:
        pass
    return 1  # v5e / v6e (single TensorCore per chip)


def _make_energy_kernel(B, T, tile, steps, num_splits, needs_mask):
    """Per-step: fold a (B, tile) chunk of both waveforms into (B, 1) partial
    signal / error energy sums held in tiny VMEM scratch."""

    def kernel(clean_ref, enh_ref, sig_out, err_out, sig_acc, err_acc):
        c_idx = pl.program_id(0)   # time-split (parallel)
        t_idx = pl.program_id(1)   # reduction step within the split

        @pl.when(t_idx == 0)
        def _():
            sig_acc[...] = jnp.zeros_like(sig_acc)
            err_acc[...] = jnp.zeros_like(err_acc)

        c = clean_ref[...].astype(jnp.float32)   # (B, tile)
        e = enh_ref[...].astype(jnp.float32)

        def accumulate(cv, ev):
            dv = cv - ev
            # VALU tree-adds across vregs + one XLU lane reduce per step;
            # accumulator stays (B, 1) so no wide scratch loads/stores.
            sig_acc[...] += jnp.sum(cv * cv, axis=-1, keepdims=True)
            err_acc[...] += jnp.sum(dv * dv, axis=-1, keepdims=True)

        if needs_mask:
            # Only the single globally-last block is partial; mask just there.
            is_tail = jnp.logical_and(c_idx == num_splits - 1, t_idx == steps - 1)
            rem = T - (num_splits * steps - 1) * tile   # static valid length

            @pl.when(is_tail)
            def _():
                lane = jax.lax.broadcasted_iota(jnp.int32, (B, tile), 1)
                valid = lane < rem
                accumulate(jnp.where(valid, c, 0.0), jnp.where(valid, e, 0.0))

            @pl.when(jnp.logical_not(is_tail))
            def _():
                accumulate(c, e)
        else:
            accumulate(c, e)

        @pl.when(t_idx == steps - 1)
        def _():
            sig_out[...] = sig_acc[...][None]   # (1, B, 1)
            err_out[...] = err_acc[...][None]

    return kernel


def metric_pesq(clean, enhanced, *, sr=16000, mode="wb", time_tile=None,
                num_splits=None):
    """clean, enhanced: [B, T] -> [B] float32 scores in [0, 1].

    TODO(synk): true ITU-T P.862 PESQ (level/time alignment, Bark filterbank,
    asymmetric disturbance aggregation, wb/nb mode handling) comes from the
    external `pesq` CPU library and has no Pallas equivalent; an SNR-based
    surrogate mapped into PESQ's [-0.5, 4.5] range is used. `sr`/`mode` are
    kept for signature parity with the reference module and are unused.
    """
    assert clean.shape == enhanced.shape
    # Stream f32/bf16 in their native dtype (cast per-tile in-kernel); anything
    # else (int16 PCM etc.) gets a single wrapper cast to f32.
    if clean.dtype != enhanced.dtype or clean.dtype not in (jnp.float32, jnp.bfloat16):
        clean = clean.astype(jnp.float32)
        enhanced = enhanced.astype(jnp.float32)
    B, T = clean.shape
    elem_bytes = jnp.dtype(clean.dtype).itemsize
    b_pad = _round_up(B, 8)                      # sublane-padded rows per VMEM buffer

    ns = int(num_splits) if num_splits is not None else _num_tensorcores()
    ns = max(1, min(ns, 8))

    # --- tile selection -----------------------------------------------------
    # VMEM cost: 2 inputs x 2 pipeline buffers of round_up(B,8)*tile*elem_bytes
    # (accumulators are tiny).  Also target ~8 MiB of HBM reads per grid step
    # so the ~0.35 us per-step overhead is amortized.
    phys_vmem = _vmem_capacity_bytes()
    buffer_budget = min(int(0.6 * phys_vmem), 64 * 1024 * 1024)
    traffic_target = 8 * 1024 * 1024
    cap_vmem = buffer_budget // (4 * b_pad * elem_bytes)
    cap_traffic = traffic_target // (2 * B * elem_bytes)
    tile0 = min(cap_vmem, cap_traffic)
    if time_tile is not None:
        tile0 = min(tile0, int(time_tile))
    tile0 = min(tile0, _round_up(_cdiv(T, ns), 128))   # don't over-allocate for short T
    tile0 = max(128, (tile0 // 128) * 128)

    steps = _cdiv(T, ns * tile0)
    tile = _round_up(_cdiv(T, ns * steps), 128)        # rebalance: overshoot < 128/step
    if (ns * steps - 1) * tile >= T:
        # Splitting would leave a block entirely past the end of the signal
        # (only for very short inputs) -> single split, guaranteed in-bounds.
        ns = 1
        steps = _cdiv(T, tile0)
        tile = _round_up(_cdiv(T, steps), 128)

    needs_mask = (ns * steps * tile) != T

    vmem_needed = 4 * b_pad * tile * elem_bytes + 8 * 1024 * 1024
    vmem_limit = int(min(max(vmem_needed, 16 * 1024 * 1024), int(0.9 * phys_vmem)))

    in_spec = pl.BlockSpec((B, tile), lambda c, t: (0, c * steps + t))
    out_spec = pl.BlockSpec((1, B, 1), lambda c, t: (c, 0, 0))

    kernel = _make_energy_kernel(B, T, tile, steps, ns, needs_mask)

    sig_parts, err_parts = pl.pallas_call(
        kernel,
        out_shape=(jax.ShapeDtypeStruct((ns, B, 1), jnp.float32),
                   jax.ShapeDtypeStruct((ns, B, 1), jnp.float32)),
        grid_spec=pltpu.PrefetchScalarGridSpec(
            num_scalar_prefetch=0,
            grid=(ns, steps),
            in_specs=[in_spec, in_spec],
            out_specs=[out_spec, out_spec],
            scratch_shapes=[
                pltpu.VMEM((B, 1), jnp.float32),
                pltpu.VMEM((B, 1), jnp.float32),
            ],
        ),
        compiler_params=pltpu.CompilerParams(
            dimension_semantics=("parallel", "arbitrary"),
            vmem_limit_bytes=vmem_limit,
        ),
        cost_estimate=pl.CostEstimate(
            flops=6 * B * T,
            transcendentals=0,
            bytes_accessed=2 * B * T * elem_bytes + 2 * ns * B * 4,
        ),
    )(clean, enhanced)

    # Epilogue in plain JAX (runs once, tiny): combine per-split partial sums,
    # map SNR -> surrogate PESQ in [-0.5, 4.5], then the exact (q+0.5)/5.0
    # normalization from the reference forward().
    sig = jnp.sum(sig_parts[:, :, 0], axis=0)     # (B,)
    err = jnp.sum(err_parts[:, :, 0], axis=0)     # (B,)
    eps = jnp.float32(1e-8)
    snr_db = 10.0 * jnp.log10((sig + eps) / (err + eps))
    q = jnp.clip(0.1 * snr_db + 1.0, -0.5, 4.5)
    return (q + 0.5) / (4.5 + 0.5)                # (B,), in [0, 1]


if __name__ == "__main__":
    B, T = 2, 1600                                # ~0.1 s of 16 kHz audio per item
    key = jax.random.PRNGKey(0)
    k_c, k_n = jax.random.split(key)
    clean = jax.random.normal(k_c, (B, T), dtype=jnp.float32)
    noise = jax.random.normal(k_n, (B, T), dtype=jnp.float32)
    enhanced = clean + 0.1 * noise

    scores = metric_pesq(clean, enhanced, sr=16000, mode="wb")
    jax.block_until_ready(scores)

    assert scores.shape == (B,)
    assert bool(jnp.all(scores >= 0.0)) and bool(jnp.all(scores <= 1.0))

    # Sanity: identical signals must saturate at the top of the range -> 1.0.
    perfect = metric_pesq(clean, clean)
    jax.block_until_ready(perfect)
    assert bool(jnp.all(jnp.abs(perfect - 1.0) < 1e-5))

    # Sanity: explicit split count + tiling override exercises the masked-tail
    # multi-step path and must agree with the single-block result.
    multi = metric_pesq(clean, enhanced, time_tile=128, num_splits=2)
    jax.block_until_ready(multi)
    assert bool(jnp.all(jnp.abs(multi - scores) < 1e-5))

    print("KERNEL_OK")
</pallas_src>

<mosaic_0001>
module attributes {stable_mosaic.version = 11 : i64} {
  func.func @kernel(%arg0: i32, %arg1: i32, %arg2: memref<2x1664xf32, #tpu.memory_space<vmem>>, %arg3: memref<2x1664xf32, #tpu.memory_space<vmem>>, %arg4: memref<1x2x1xf32, #tpu.memory_space<vmem>>, %arg5: memref<1x2x1xf32, #tpu.memory_space<vmem>>, %arg6: memref<2x1xf32, #tpu.memory_space<vmem>>, %arg7: memref<2x1xf32, #tpu.memory_space<vmem>>) attributes {dimension_semantics = [#tpu.dimension_semantics<parallel>, #tpu.dimension_semantics<arbitrary>], iteration_bounds = array<i64: 1, 1>, scalar_prefetch = 0 : i64, scratch_operands = 2 : i64, tpu.core_type = #tpu.core_type<tc>, window_params = [{transform_indices = @transform_0, window_bounds = array<i64: 2, 1664>}, {transform_indices = @transform_1, window_bounds = array<i64: 2, 1664>}, {transform_indices = @transform_2, window_bounds = array<i64: 1, 2, 1>}, {transform_indices = @transform_3, window_bounds = array<i64: 1, 2, 1>}]} {
    %c0_i32 = arith.constant 0 : i32
    %0 = arith.cmpi eq, %arg1, %c0_i32 : i32
    %1 = arith.extui %0 : i1 to i32
    %c0_i32_0 = arith.constant 0 : i32
    %2 = arith.cmpi ne, %1, %c0_i32_0 : i32
    scf.if %2 {
      %cst = arith.constant 0.000000e+00 : f32
      %16 = vector.broadcast %cst : f32 to vector<2x1xf32>
      %c0_10 = arith.constant 0 : index
      %c0_11 = arith.constant 0 : index
      %17 = vector.load %arg6[%c0_10, %c0_11] : memref<2x1xf32, #tpu.memory_space<vmem>>, vector<2x1xf32>
      tpu.vector_store %arg6[%c0_10, %c0_11], %16 {strides = array<i32>} : memref<2x1xf32, #tpu.memory_space<vmem>>, vector<2x1xf32>,
      %cst_12 = arith.constant 0.000000e+00 : f32
      %18 = vector.broadcast %cst_12 : f32 to vector<2x1xf32>
      %c0_13 = arith.constant 0 : index
      %c0_14 = arith.constant 0 : index
      %19 = vector.load %arg7[%c0_13, %c0_14] : memref<2x1xf32, #tpu.memory_space<vmem>>, vector<2x1xf32>
      tpu.vector_store %arg7[%c0_13, %c0_14], %18 {strides = array<i32>} : memref<2x1xf32, #tpu.memory_space<vmem>>, vector<2x1xf32>,
    } else {
    }
    %c0 = arith.constant 0 : index
    %c0_1 = arith.constant 0 : index
    %3 = vector.load %arg2[%c0, %c0_1] : memref<2x1664xf32, #tpu.memory_space<vmem>>, vector<2x1664xf32>
    %c0_2 = arith.constant 0 : index
    %c0_3 = arith.constant 0 : index
    %4 = vector.load %arg3[%c0_2, %c0_3] : memref<2x1664xf32, #tpu.memory_space<vmem>>, vector<2x1664xf32>
    %c0_i32_4 = arith.constant 0 : i32
    %5 = arith.cmpi eq, %arg0, %c0_i32_4 : i32
    %c0_i32_5 = arith.constant 0 : i32
    %6 = arith.cmpi eq, %arg1, %c0_i32_5 : i32
    %7 = arith.andi %5, %6 : i1
    %8 = arith.extui %7 : i1 to i32
    %c0_i32_6 = arith.constant 0 : i32
    %9 = arith.cmpi ne, %8, %c0_i32_6 : i32
    scf.if %9 {
      %16 = tpu.iota {dimensions = array<i32: 1>} : vector<2x1664xi32>
      %c1600_i32 = arith.constant 1600 : i32
      %17 = vector.broadcast %c1600_i32 : i32 to vector<2x1664xi32>
      %18 = arith.cmpi slt, %16, %17 : vector<2x1664xi32>
      %cst = arith.constant 0.000000e+00 : f32
      %19 = vector.broadcast %cst : f32 to vector<2x1664xf32>
      %20 = arith.select %18, %3, %19 : vector<2x1664xi1>, vector<2x1664xf32>
      %cst_10 = arith.constant 0.000000e+00 : f32
      %21 = vector.broadcast %cst_10 : f32 to vector<2x1664xf32>
      %22 = arith.select %18, %4, %21 : vector<2x1664xi1>, vector<2x1664xf32>
      %23 = arith.subf %20, %22 : vector<2x1664xf32>
      %c0_11 = arith.constant 0 : index
      %c0_12 = arith.constant 0 : index
      %24 = vector.load %arg6[%c0_11, %c0_12] : memref<2x1xf32, #tpu.memory_space<vmem>>, vector<2x1xf32>
      %25 = arith.mulf %20, %20 : vector<2x1664xf32>
      %cst_13 = arith.constant dense<0.000000e+00> : vector<2xf32>
      %26 = vector.multi_reduction <add>, %25, %cst_13 [1] : vector<2x1664xf32> to vector<2xf32>
      %27 = vector.shape_cast %26 : vector<2xf32> to vector<2x1xf32>
      %28 = arith.addf %24, %27 : vector<2x1xf32>
      %c0_14 = arith.constant 0 : index
      %c0_15 = arith.constant 0 : index
      %29 = vector.load %arg6[%c0_14, %c0_15] : memref<2x1xf32, #tpu.memory_space<vmem>>, vector<2x1xf32>
      tpu.vector_store %arg6[%c0_14, %c0_15], %28 {strides = array<i32>} : memref<2x1xf32, #tpu.memory_space<vmem>>, vector<2x1xf32>,
      %c0_16 = arith.constant 0 : index
      %c0_17 = arith.constant 0 : index
      %30 = vector.load %arg7[%c0_16, %c0_17] : memref<2x1xf32, #tpu.memory_space<vmem>>, vector<2x1xf32>
      %31 = arith.mulf %23, %23 : vector<2x1664xf32>
      %cst_18 = arith.constant dense<0.000000e+00> : vector<2xf32>
      %32 = vector.multi_reduction <add>, %31, %cst_18 [1] : vector<2x1664xf32> to vector<2xf32>
      %33 = vector.shape_cast %32 : vector<2xf32> to vector<2x1xf32>
      %34 = arith.addf %30, %33 : vector<2x1xf32>
      %c0_19 = arith.constant 0 : index
      %c0_20 = arith.constant 0 : index
      %35 = vector.load %arg7[%c0_19, %c0_20] : memref<2x1xf32, #tpu.memory_space<vmem>>, vector<2x1xf32>
      tpu.vector_store %arg7[%c0_19, %c0_20], %34 {strides = array<i32>} : memref<2x1xf32, #tpu.memory_space<vmem>>, vector<2x1xf32>,
    } else {
    }
    %true = arith.constant true
    %10 = arith.xori %7, %true : i1
    %11 = arith.extui %10 : i1 to i32
    %c0_i32_7 = arith.constant 0 : i32
    %12 = arith.cmpi ne, %11, %c0_i32_7 : i32
    scf.if %12 {
      %16 = arith.subf %3, %4 : vector<2x1664xf32>
      %c0_10 = arith.constant 0 : index
      %c0_11 = arith.constant 0 : index
      %17 = vector.load %arg6[%c0_10, %c0_11] : memref<2x1xf32, #tpu.memory_space<vmem>>, vector<2x1xf32>
      %18 = arith.mulf %3, %3 : vector<2x1664xf32>
      %cst = arith.constant dense<0.000000e+00> : vector<2xf32>
      %19 = vector.multi_reduction <add>, %18, %cst [1] : vector<2x1664xf32> to vector<2xf32>
      %20 = vector.shape_cast %19 : vector<2xf32> to vector<2x1xf32>
      %21 = arith.addf %17, %20 : vector<2x1xf32>
      %c0_12 = arith.constant 0 : index
      %c0_13 = arith.constant 0 : index
      %22 = vector.load %arg6[%c0_12, %c0_13] : memref<2x1xf32, #tpu.memory_space<vmem>>, vector<2x1xf32>
      tpu.vector_store %arg6[%c0_12, %c0_13], %21 {strides = array<i32>} : memref<2x1xf32, #tpu.memory_space<vmem>>, vector<2x1xf32>,
      %c0_14 = arith.constant 0 : index
      %c0_15 = arith.constant 0 : index
      %23 = vector.load %arg7[%c0_14, %c0_15] : memref<2x1xf32, #tpu.memory_space<vmem>>, vector<2x1xf32>
      %24 = arith.mulf %16, %16 : vector<2x1664xf32>
      %cst_16 = arith.constant dense<0.000000e+00> : vector<2xf32>
      %25 = vector.multi_reduction <add>, %24, %cst_16 [1] : vector<2x1664xf32> to vector<2xf32>
      %26 = vector.shape_cast %25 : vector<2xf32> to vector<2x1xf32>
      %27 = arith.addf %23, %26 : vector<2x1xf32>
      %c0_17 = arith.constant 0 : index
      %c0_18 = arith.constant 0 : index
      %28 = vector.load %arg7[%c0_17, %c0_18] : memref<2x1xf32, #tpu.memory_space<vmem>>, vector<2x1xf32>
      tpu.vector_store %arg7[%c0_17, %c0_18], %27 {strides = array<i32>} : memref<2x1xf32, #tpu.memory_space<vmem>>, vector<2x1xf32>,
    } else {
    }
    %c0_i32_8 = arith.constant 0 : i32
    %13 = arith.cmpi eq, %arg1, %c0_i32_8 : i32
    %14 = arith.extui %13 : i1 to i32
    %c0_i32_9 = arith.constant 0 : i32
    %15 = arith.cmpi ne, %14, %c0_i32_9 : i32
    scf.if %15 {
      %c0_10 = arith.constant 0 : index
      %c0_11 = arith.constant 0 : index
      %16 = vector.load %arg6[%c0_10, %c0_11] : memref<2x1xf32, #tpu.memory_space<vmem>>, vector<2x1xf32>
      %17 = vector.shape_cast %16 : vector<2x1xf32> to vector<1x2x1xf32>
      %c0_12 = arith.constant 0 : index
      %c0_13 = arith.constant 0 : index
      %c0_14 = arith.constant 0 : index
      %18 = vector.load %arg4[%c0_12, %c0_13, %c0_14] : memref<1x2x1xf32, #tpu.memory_space<vmem>>, vector<1x2x1xf32>
      tpu.vector_store %arg4[%c0_12, %c0_13, %c0_14], %17 {strides = array<i32>} : memref<1x2x1xf32, #tpu.memory_space<vmem>>, vector<1x2x1xf32>,
      %c0_15 = arith.constant 0 : index
      %c0_16 = arith.constant 0 : index
      %19 = vector.load %arg7[%c0_15, %c0_16] : memref<2x1xf32, #tpu.memory_space<vmem>>, vector<2x1xf32>
      %20 = vector.shape_cast %19 : vector<2x1xf32> to vector<1x2x1xf32>
      %c0_17 = arith.constant 0 : index
      %c0_18 = arith.constant 0 : index
      %c0_19 = arith.constant 0 : index
      %21 = vector.load %arg5[%c0_17, %c0_18, %c0_19] : memref<1x2x1xf32, #tpu.memory_space<vmem>>, vector<1x2x1xf32>
      tpu.vector_store %arg5[%c0_17, %c0_18, %c0_19], %20 {strides = array<i32>} : memref<1x2x1xf32, #tpu.memory_space<vmem>>, vector<1x2x1xf32>,
    } else {
    }
    return
  }
  func.func @transform_0(%arg0: i32, %arg1: i32) -> (i32, i32) {
    %c1_i32 = arith.constant 1 : i32
    %0 = arith.muli %arg0, %c1_i32 : i32
    %1 = arith.addi %0, %arg1 : i32
    %c0_i32 = arith.constant 0 : i32
    %c0_i32_0 = arith.constant 0 : i32
    return %c0_i32, %1 : i32, i32
  }
  func.func @transform_1(%arg0: i32, %arg1: i32) -> (i32, i32) {
    %c1_i32 = arith.constant 1 : i32
    %0 = arith.muli %arg0, %c1_i32 : i32
    %1 = arith.addi %0, %arg1 : i32
    %c0_i32 = arith.constant 0 : i32
    %c0_i32_0 = arith.constant 0 : i32
    return %c0_i32, %1 : i32, i32
  }
  func.func @transform_2(%arg0: i32, %arg1: i32) -> (i32, i32, i32) {
    %c0_i32 = arith.constant 0 : i32
    %c0_i32_0 = arith.constant 0 : i32
    %c0_i32_1 = arith.constant 0 : i32
    return %arg0, %c0_i32, %c0_i32_0 : i32, i32, i32
  }
  func.func @transform_3(%arg0: i32, %arg1: i32) -> (i32, i32, i32) {
    %c0_i32 = arith.constant 0 : i32
    %c0_i32_0 = arith.constant 0 : i32
    %c0_i32_1 = arith.constant 0 : i32
    return %arg0, %c0_i32, %c0_i32_0 : i32, i32, i32
  }
}

</mosaic_0001>

<llo_original>
// kernel: tpu_custom_call.1
$region0: #{tpu_custom_call.1}
  #allocation0 [shape = 'u32[]', space=smem, size = 0x4, offset = 0x4, fixed_abs, tag = 'smem constant byte address 0x4 - core index']
  #allocation1 [shape = 'u32[72,128]{1,0:T(1,128)}', space=vmem, size = 0x9000, scoped, tag = 'internal scratch']
  #allocation2 [shape = 'f32[2,1]{1,0:T(2,128)}', space=vmem, size = 0x400, scoped, tag = 'scratch operand']
  #allocation3 [shape = 'f32[2,1]{1,0:T(2,128)}', space=vmem, size = 0x400, scoped, tag = 'scratch operand']
  %s0 = inlined_call_operand.hbm [shape: f32[2,1600], index: 0, kind: input, shape index: {}]
  %s1 = inlined_call_operand.hbm [shape: f32[2,1600], index: 1, kind: input, shape index: {}]
  %s2 = inlined_call_operand.vmem [shape: f32[1,2,1], index: 2, kind: output, shape index: {0}]
  %s3 = inlined_call_operand.vmem [shape: f32[1,2,1], index: 3, kind: output, shape index: {1}]
  %4 = xla_tuple %s2, %s3
  %s5 = sld [smem:[#allocation0]]
  $region50: #{tpu_custom_call.1} parent=0
    _
  %s7 = ssub.s32 1, %s5
  %s8 = scalar_select 0, %s7, %s5
  $region1: #{tpu_custom_call.1} parent=0
    #allocation4 [shape = 'u8[13312]{0}', space=vmem, size = 0x3400, scoped, tag = 'input window, operand 0, single buffered']
    #allocation5 [shape = 's32[1]{0}', space=sflag, size = 0x4, scoped, tag = 'scoped memory for tpu_custom_call.1']
    #allocation6 [shape = 'u8[13312]{0}', space=vmem, size = 0x3400, scoped, tag = 'input window, operand 1, single buffered']
    #allocation7 [shape = 's32[1]{0}', space=sflag, size = 0x4, scoped, tag = 'scoped memory for tpu_custom_call.1']
    %9 = vsyncpa [#allocation5], 0
    %10 = vsyncpa [#allocation7], 0
    // Predicated region
    $region2: #{tpu_custom_call.1} parent=1 // pred_check
      _
    $region3: #{tpu_custom_call.1} parent=1 // pred_check_branch
      %12 = sbr.rel (0) target = $region5
    $region4: #{tpu_custom_call.1} parent=1 // pred_region
      %s13 = sadd.s32 0, 0
      %s14 = smul.u32 13, %s13
      %16 = vsyncadd [#allocation5], 0
      %s17 = smul.addr %s14, 2
      %s18 = scalar_lea.hbm %s0, %s17
      %s20 = sshll.u32 %s18, 4
      %s21 = int_to_ptr.hbm [resolvable:$true] %s20
      %s22 = sshll.u32 [#allocation4], 4
      %s23 = int_to_ptr.vmem [resolvable:$true] %s22
      %25 = dma.hbm_to_vmem [thread:$0]  %s21, 416, %s23, [#allocation5]
    $region5: #{tpu_custom_call.1} parent=1 // pred_fallthru
      _
    // Predicated region
    $region6: #{tpu_custom_call.1} parent=1 // pred_check
      _
    $region7: #{tpu_custom_call.1} parent=1 // pred_check_branch
      %27 = sbr.rel (0) target = $region9
    $region8: #{tpu_custom_call.1} parent=1 // pred_region
      %s28 = sadd.s32 0, 0
      %s29 = smul.u32 13, %s28
      %31 = vsyncadd [#allocation7], 0
      %s32 = smul.addr %s29, 2
      %s33 = scalar_lea.hbm %s1, %s32
      %s35 = sshll.u32 %s33, 4
      %s36 = int_to_ptr.hbm [resolvable:$true] %s35
      %s37 = sshll.u32 [#allocation6], 4
      %s38 = int_to_ptr.vmem [resolvable:$true] %s37
      %40 = dma.hbm_to_vmem [thread:$0]  %s36, 416, %s38, [#allocation7]
    $region9: #{tpu_custom_call.1} parent=1 // pred_fallthru
      _
    // Predicated region
    $region10: #{tpu_custom_call.1} parent=1 // pred_check
      _
    $region11: #{tpu_custom_call.1} parent=1 // pred_check_branch
      %42 = sbr.rel (0) target = $region13
    $region12: #{tpu_custom_call.1} parent=1 // pred_region
      %44 = dma.done [#allocation5], 416
    $region13: #{tpu_custom_call.1} parent=1 // pred_fallthru
      _
    // Predicated region
    $region14: #{tpu_custom_call.1} parent=1 // pred_check
      _
    $region15: #{tpu_custom_call.1} parent=1 // pred_check_branch
      %46 = sbr.rel (0) target = $region17
    $region16: #{tpu_custom_call.1} parent=1 // pred_region
      %48 = dma.done [#allocation7], 416
    $region17: #{tpu_custom_call.1} parent=1 // pred_fallthru
      _
    %s49 = sadd.s32 0, 0
    %s50 = smul.u32 13, %s49
    %s51 = sadd.s32 0, 0
    %s52 = smul.u32 13, %s51
    %p53 = scmp.eq.s32.totalorder 0, 0
    // Predicated region
    $region18: #{tpu_custom_call.1} parent=1 // pred_check
      %p54 = pneg %p53
    $region19: #{tpu_custom_call.1} parent=1 // pred_check_branch
      %56 = sbr.rel (%p54) target = $region21
    $region20: #{tpu_custom_call.1} parent=1 // pred_region
      %vm57 = vcmask 1024
      %58 = vst.msk [vmem:[#allocation2] sm:$0x3] %vm57, 0.0
      %59 = vst.msk [vmem:[#allocation3] sm:$0x3] %vm57, 0.0
    $region21: #{tpu_custom_call.1} parent=1 // pred_fallthru
      _
    %v60 = vld [vmem:[#allocation4] sm:$0xff]
    %v61 = vld [vmem:[#allocation4 + $0x8] sm:$0xff]
    %v62 = vld [vmem:[#allocation4 + $0x10] sm:$0xff]
    %v63 = vld [vmem:[#allocation4 + $0x18] sm:$0x3]
    %v64 = vld [vmem:[#allocation6] sm:$0xff]
    %v65 = vld [vmem:[#allocation6 + $0x8] sm:$0xff]
    %v66 = vld [vmem:[#allocation6 + $0x10] sm:$0xff]
    %v67 = vld [vmem:[#allocation6 + $0x18] sm:$0x3]
    %p68 = scmp.eq.s32.totalorder 0, 0
    %p69 = pnand %p68, %p53
    %p70 = pneg %p69
    // Predicated region
    $region22: #{tpu_custom_call.1} parent=1 // pred_check
      _
    $region23: #{tpu_custom_call.1} parent=1 // pred_check_branch
      %72 = sbr.rel (%p69) target = $region25
    $region24: #{tpu_custom_call.1} parent=1 // pred_region
      %v73 = vlaneseq
      %v74 = vand.u32 %v73, 127
      %v75 = vadd.s32 %v74, 128
      %v76 = vadd.s32 %v74, 256
      %v77 = vadd.s32 %v74, 384
      %v78 = vadd.s32 %v74, 512
      %v79 = vadd.s32 %v74, 640
      %v80 = vadd.s32 %v74, 768
      %v81 = vadd.s32 %v74, 896
      %v82 = vadd.s32 %v74, 1024
      %v83 = vadd.s32 %v74, 1152
      %v84 = vadd.s32 %v74, 1280
      %v85 = vadd.s32 %v74, 1408
      %v86 = vadd.s32 %v74, 1536
      %vm87 = vcmp.lt.s32.totalorder %v74, 1600
      %vm88 = vcmp.lt.s32.totalorder %v75, 1600
      %vm89 = vcmp.lt.s32.totalorder %v76, 1600
      %vm90 = vcmp.lt.s32.totalorder %v77, 1600
      %vm91 = vcmp.lt.s32.totalorder %v78, 1600
      %vm92 = vcmp.lt.s32.totalorder %v79, 1600
      %vm93 = vcmp.lt.s32.totalorder %v80, 1600
      %vm94 = vcmp.lt.s32.totalorder %v81, 1600
      %vm95 = vcmp.lt.s32.totalorder %v82, 1600
      %vm96 = vcmp.lt.s32.totalorder %v83, 1600
      %vm97 = vcmp.lt.s32.totalorder %v84, 1600
      %vm98 = vcmp.lt.s32.totalorder %v85, 1600
      %vm99 = vcmp.lt.s32.totalorder %v86, 1600
      %104 = vst [vmem:[#allocation1] ss:$4 sm:$0xff] %v60
      %s105 = scalar_lea.vmem [#allocation1], 32
      %106 = vst [vmem:[%s105] ss:$4 sm:$0xff] %v61
      %v107 = vld.sshfl [vmem:[#allocation1] sm:$0xff pattern:$0x73625140]
      %v108 = vld.sshfl [vmem:[#allocation1 + $0x8] sm:$0xff pattern:$0x73625140]
      %v109 = vld.sshfl [vmem:[#allocation1 + $0x10] sm:$0xff pattern:$0x73625140]
      %v110 = vld.sshfl [vmem:[#allocation1 + $0x18] sm:$0xff pattern:$0x73625140]
      %v111 = vld.sshfl [vmem:[#allocation1 + $0x20] sm:$0xff pattern:$0x73625140]
      %v112 = vld.sshfl [vmem:[#allocation1 + $0x28] sm:$0xff pattern:$0x73625140]
      %v113 = vld.sshfl [vmem:[#allocation1 + $0x30] sm:$0xff pattern:$0x73625140]
      %v114 = vld.sshfl [vmem:[#allocation1 + $0x38] sm:$0xff pattern:$0x73625140]
      %115 = vst [vmem:[#allocation1] ss:$4 sm:$0xff] %v62
      %116 = vst [vmem:[%s105] ss:$4 sm:$0xff] %v63
      %v117 = vld.sshfl [vmem:[#allocation1] sm:$0xff pattern:$0x73625140]
      %v118 = vld.sshfl [vmem:[#allocation1 + $0x8] sm:$0xff pattern:$0x73625140]
      %v119 = vld.sshfl [vmem:[#allocation1 + $0x10] sm:$0xff pattern:$0x73625140]
      %v120 = vld.sshfl [vmem:[#allocation1 + $0x18] sm:$0xff pattern:$0x73625140]
      %v121 = vld.sshfl [vmem:[#allocation1 + $0x20] sm:$0xff pattern:$0x73625140]
      %v135 = vsel %vm87, %v107, 0.0
      %v136 = vsel %vm88, %v108, 0.0
      %v137 = vsel %vm89, %v109, 0.0
      %v138 = vsel %vm90, %v110, 0.0
      %v139 = vsel %vm91, %v111, 0.0
      %v140 = vsel %vm92, %v112, 0.0
      %v141 = vsel %vm93, %v113, 0.0
      %v142 = vsel %vm94, %v114, 0.0
      %v143 = vsel %vm95, %v117, 0.0
      %v144 = vsel %vm96, %v118, 0.0
      %v145 = vsel %vm97, %v119, 0.0
      %v146 = vsel %vm98, %v120, 0.0
      %v147 = vsel %vm99, %v121, 0.0
      %152 = vst [vmem:[#allocation1] ss:$4 sm:$0xff] %v64
      %s153 = scalar_lea.vmem [#allocation1], 32
      %154 = vst [vmem:[%s153] ss:$4 sm:$0xff] %v65
      %v155 = vld.sshfl [vmem:[#allocation1] sm:$0xff pattern:$0x73625140]
      %v156 = vld.sshfl [vmem:[#allocation1 + $0x8] sm:$0xff pattern:$0x73625140]
      %v157 = vld.sshfl [vmem:[#allocation1 + $0x10] sm:$0xff pattern:$0x73625140]
      %v158 = vld.sshfl [vmem:[#allocation1 + $0x18] sm:$0xff pattern:$0x73625140]
      %v159 = vld.sshfl [vmem:[#allocation1 + $0x20] sm:$0xff pattern:$0x73625140]
      %v160 = vld.sshfl [vmem:[#allocation1 + $0x28] sm:$0xff pattern:$0x73625140]
      %v161 = vld.sshfl [vmem:[#allocation1 + $0x30] sm:$0xff pattern:$0x73625140]
      %v162 = vld.sshfl [vmem:[#allocation1 + $0x38] sm:$0xff pattern:$0x73625140]
      %163 = vst [vmem:[#allocation1] ss:$4 sm:$0xff] %v66
      %164 = vst [vmem:[%s153] ss:$4 sm:$0xff] %v67
      %v165 = vld.sshfl [vmem:[#allocation1] sm:$0xff pattern:$0x73625140]
      %v166 = vld.sshfl [vmem:[#allocation1 + $0x8] sm:$0xff pattern:$0x73625140]
      %v167 = vld.sshfl [vmem:[#allocation1 + $0x10] sm:$0xff pattern:$0x73625140]
      %v168 = vld.sshfl [vmem:[#allocation1 + $0x18] sm:$0xff pattern:$0x73625140]
      %v169 = vld.sshfl [vmem:[#allocation1 + $0x20] sm:$0xff pattern:$0x73625140]
      %v183 = vsel %vm87, %v155, 0.0
      %v184 = vsel %vm88, %v156, 0.0
      %v185 = vsel %vm89, %v157, 0.0
      %v186 = vsel %vm90, %v158, 0.0
      %v187 = vsel %vm91, %v159, 0.0
      %v188 = vsel %vm92, %v160, 0.0
      %v189 = vsel %vm93, %v161, 0.0
      %v190 = vsel %vm94, %v162, 0.0
      %v191 = vsel %vm95, %v165, 0.0
      %v192 = vsel %vm96, %v166, 0.0
      %v193 = vsel %vm97, %v167, 0.0
      %v194 = vsel %vm98, %v168, 0.0
      %v195 = vsel %vm99, %v169, 0.0
      %v196 = vsub.f32 %v135, %v183
      %v197 = vsub.f32 %v136, %v184
      %v198 = vsub.f32 %v137, %v185
      %v199 = vsub.f32 %v138, %v186
      %v200 = vsub.f32 %v139, %v187
      %v201 = vsub.f32 %v140, %v188
      %v202 = vsub.f32 %v141, %v189
      %v203 = vsub.f32 %v142, %v190
      %v204 = vsub.f32 %v143, %v191
      %v205 = vsub.f32 %v144, %v192
      %v206 = vsub.f32 %v145, %v193
      %v207 = vsub.f32 %v146, %v194
      %v208 = vsub.f32 %v147, %v195
      %v209 = vld [vmem:[#allocation2] sm:$0x3]
      %v210 = vmul.f32 %v135, %v135
      %v211 = vmul.f32 %v136, %v136
      %v212 = vmul.f32 %v137, %v137
      %v213 = vmul.f32 %v138, %v138
      %v214 = vmul.f32 %v139, %v139
      %v215 = vmul.f32 %v140, %v140
      %v216 = vmul.f32 %v141, %v141
      %v217 = vmul.f32 %v142, %v142
      %v218 = vmul.f32 %v143, %v143
      %v219 = vmul.f32 %v144, %v144
      %v220 = vmul.f32 %v145, %v145
      %v221 = vmul.f32 %v146, %v146
      %v222 = vmul.f32 %v147, %v147
      %vm223 = vcmask 1041408
      %v224 = vsel %vm223, %v210, 0.0
      %v225 = vsel %vm223, %v211, 0.0
      %v226 = vadd.f32 %v224, %v225
      %v227 = vsel %vm223, %v212, 0.0
      %v228 = vadd.f32 %v226, %v227
      %v229 = vsel %vm223, %v213, 0.0
      %v230 = vadd.f32 %v228, %v229
      %v231 = vsel %vm223, %v214, 0.0
      %v232 = vadd.f32 %v230, %v231
      %v233 = vsel %vm223, %v215, 0.0
      %v234 = vadd.f32 %v232, %v233
      %v235 = vsel %vm223, %v216, 0.0
      %v236 = vadd.f32 %v234, %v235
      %v237 = vsel %vm223, %v217, 0.0
      %v238 = vadd.f32 %v236, %v237
      %v239 = vsel %vm223, %v218, 0.0
      %v240 = vadd.f32 %v238, %v239
      %v241 = vsel %vm223, %v219, 0.0
      %v242 = vadd.f32 %v240, %v241
      %v243 = vsel %vm223, %v220, 0.0
      %v244 = vadd.f32 %v242, %v243
      %v245 = vsel %vm223, %v221, 0.0
      %v246 = vadd.f32 %v244, %v245
      %v247 = vsel %vm223, %v222, 0.0
      %v248 = vadd.f32 %v246, %v247
      %249 = vadd.xlane.f32.xlu0 %v248
      %v250 = vpop.xlane.xlu0 %249
      %v251 = vadd.f32 %v209, %v250
      %vm252 = vcmask 1024
      %253 = vst.msk [vmem:[#allocation2] sm:$0x3] %vm252, %v251
      %v254 = vld [vmem:[#allocation3] sm:$0x3]
      %v255 = vmul.f32 %v196, %v196
      %v256 = vmul.f32 %v197, %v197
      %v257 = vmul.f32 %v198, %v198
      %v258 = vmul.f32 %v199, %v199
      %v259 = vmul.f32 %v200, %v200
      %v260 = vmul.f32 %v201, %v201
      %v261 = vmul.f32 %v202, %v202
      %v262 = vmul.f32 %v203, %v203
      %v263 = vmul.f32 %v204, %v204
      %v264 = vmul.f32 %v205, %v205
      %v265 = vmul.f32 %v206, %v206
      %v266 = vmul.f32 %v207, %v207
      %v267 = vmul.f32 %v208, %v208
      %v268 = vsel %vm223, %v255, 0.0
      %v269 = vsel %vm223, %v256, 0.0
      %v270 = vadd.f32 %v268, %v269
      %v271 = vsel %vm223, %v257, 0.0
      %v272 = vadd.f32 %v270, %v271
      %v273 = vsel %vm223, %v258, 0.0
      %v274 = vadd.f32 %v272, %v273
      %v275 = vsel %vm223, %v259, 0.0
      %v276 = vadd.f32 %v274, %v275
      %v277 = vsel %vm223, %v260, 0.0
      %v278 = vadd.f32 %v276, %v277
      %v279 = vsel %vm223, %v261, 0.0
      %v280 = vadd.f32 %v278, %v279
      %v281 = vsel %vm223, %v262, 0.0
      %v282 = vadd.f32 %v280, %v281
      %v283 = vsel %vm223, %v263, 0.0
      %v284 = vadd.f32 %v282, %v283
      %v285 = vsel %vm223, %v264, 0.0
      %v286 = vadd.f32 %v284, %v285
      %v287 = vsel %vm223, %v265, 0.0
      %v288 = vadd.f32 %v286, %v287
      %v289 = vsel %vm223, %v266, 0.0
      %v290 = vadd.f32 %v288, %v289
      %v291 = vsel %vm223, %v267, 0.0
      %v292 = vadd.f32 %v290, %v291
      %293 = vadd.xlane.f32.xlu0 %v292
      %v294 = vpop.xlane.xlu0 %293
      %v295 = vadd.f32 %v254, %v294
      %296 = vst.msk [vmem:[#allocation3] sm:$0x3] %vm252, %v295
    $region25: #{tpu_custom_call.1} parent=1 // pred_fallthru
      _
    %p297 = pneg %p70
    // Predicated region
    $region26: #{tpu_custom_call.1} parent=1 // pred_check
      _
    $region27: #{tpu_custom_call.1} parent=1 // pred_check_branch
      %299 = sbr.rel (%p70) target = $region29
    $region28: #{tpu_custom_call.1} parent=1 // pred_region
      %v300 = vsub.f32 %v60, %v64
      %v301 = vsub.f32 %v61, %v65
      %v302 = vsub.f32 %v62, %v66
      %v303 = vsub.f32 %v63, %v67
      %v304 = vld [vmem:[#allocation2] sm:$0x3]
      %v305 = vmul.f32 %v60, %v60
      %v306 = vmul.f32 %v61, %v61
      %v307 = vmul.f32 %v62, %v62
      %v308 = vmul.f32 %v63, %v63
      %313 = vst [vmem:[#allocation1] ss:$4 sm:$0xff] %v305
      %s314 = scalar_lea.vmem [#allocation1], 32
      %315 = vst [vmem:[%s314] ss:$4 sm:$0xff] %v306
      %v316 = vld.sshfl [vmem:[#allocation1] sm:$0xff pattern:$0x73625140]
      %v317 = vld.sshfl [vmem:[#allocation1 + $0x8] sm:$0xff pattern:$0x73625140]
      %v318 = vld.sshfl [vmem:[#allocation1 + $0x10] sm:$0xff pattern:$0x73625140]
      %v319 = vld.sshfl [vmem:[#allocation1 + $0x18] sm:$0xff pattern:$0x73625140]
      %v320 = vld.sshfl [vmem:[#allocation1 + $0x20] sm:$0xff pattern:$0x73625140]
      %v321 = vld.sshfl [vmem:[#allocation1 + $0x28] sm:$0xff pattern:$0x73625140]
      %v322 = vld.sshfl [vmem:[#allocation1 + $0x30] sm:$0xff pattern:$0x73625140]
      %v323 = vld.sshfl [vmem:[#allocation1 + $0x38] sm:$0xff pattern:$0x73625140]
      %324 = vst [vmem:[#allocation1] ss:$4 sm:$0xff] %v307
      %325 = vst [vmem:[%s314] ss:$4 sm:$0xff] %v308
      %v326 = vld.sshfl [vmem:[#allocation1] sm:$0xff pattern:$0x73625140]
      %v327 = vld.sshfl [vmem:[#allocation1 + $0x8] sm:$0xff pattern:$0x73625140]
      %v328 = vld.sshfl [vmem:[#allocation1 + $0x10] sm:$0xff pattern:$0x73625140]
      %v329 = vld.sshfl [vmem:[#allocation1 + $0x18] sm:$0xff pattern:$0x73625140]
      %v330 = vld.sshfl [vmem:[#allocation1 + $0x20] sm:$0xff pattern:$0x73625140]
      %vm344 = vcmask 1041408
      %v345 = vsel %vm344, %v316, 0.0
      %v346 = vsel %vm344, %v317, 0.0
      %v347 = vadd.f32 %v345, %v346
      %v348 = vsel %vm344, %v318, 0.0
      %v349 = vadd.f32 %v347, %v348
      %v350 = vsel %vm344, %v319, 0.0
      %v351 = vadd.f32 %v349, %v350
      %v352 = vsel %vm344, %v320, 0.0
      %v353 = vadd.f32 %v351, %v352
      %v354 = vsel %vm344, %v321, 0.0
      %v355 = vadd.f32 %v353, %v354
      %v356 = vsel %vm344, %v322, 0.0
      %v357 = vadd.f32 %v355, %v356
      %v358 = vsel %vm344, %v323, 0.0
      %v359 = vadd.f32 %v357, %v358
      %v360 = vsel %vm344, %v326, 0.0
      %v361 = vadd.f32 %v359, %v360
      %v362 = vsel %vm344, %v327, 0.0
      %v363 = vadd.f32 %v361, %v362
      %v364 = vsel %vm344, %v328, 0.0
      %v365 = vadd.f32 %v363, %v364
      %v366 = vsel %vm344, %v329, 0.0
      %v367 = vadd.f32 %v365, %v366
      %v368 = vsel %vm344, %v330, 0.0
      %v369 = vadd.f32 %v367, %v368
      %370 = vadd.xlane.f32.xlu0 %v369
      %v371 = vpop.xlane.xlu0 %370
      %v372 = vadd.f32 %v304, %v371
      %vm373 = vcmask 1024
      %374 = vst.msk [vmem:[#allocation2] sm:$0x3] %vm373, %v372
      %v375 = vld [vmem:[#allocation3] sm:$0x3]
      %v376 = vmul.f32 %v300, %v300
      %v377 = vmul.f32 %v301, %v301
      %v378 = vmul.f32 %v302, %v302
      %v379 = vmul.f32 %v303, %v303
      %384 = vst [vmem:[#allocation1] ss:$4 sm:$0xff] %v376
      %s385 = scalar_lea.vmem [#allocation1], 32
      %386 = vst [vmem:[%s385] ss:$4 sm:$0xff] %v377
      %v387 = vld.sshfl [vmem:[#allocation1] sm:$0xff pattern:$0x73625140]
      %v388 = vld.sshfl [vmem:[#allocation1 + $0x8] sm:$0xff pattern:$0x73625140]
      %v389 = vld.sshfl [vmem:[#allocation1 + $0x10] sm:$0xff pattern:$0x73625140]
      %v390 = vld.sshfl [vmem:[#allocation1 + $0x18] sm:$0xff pattern:$0x73625140]
      %v391 = vld.sshfl [vmem:[#allocation1 + $0x20] sm:$0xff pattern:$0x73625140]
      %v392 = vld.sshfl [vmem:[#allocation1 + $0x28] sm:$0xff pattern:$0x73625140]
      %v393 = vld.sshfl [vmem:[#allocation1 + $0x30] sm:$0xff pattern:$0x73625140]
      %v394 = vld.sshfl [vmem:[#allocation1 + $0x38] sm:$0xff pattern:$0x73625140]
      %395 = vst [vmem:[#allocation1] ss:$4 sm:$0xff] %v378
      %396 = vst [vmem:[%s385] ss:$4 sm:$0xff] %v379
      %v397 = vld.sshfl [vmem:[#allocation1] sm:$0xff pattern:$0x73625140]
      %v398 = vld.sshfl [vmem:[#allocation1 + $0x8] sm:$0xff pattern:$0x73625140]
      %v399 = vld.sshfl [vmem:[#allocation1 + $0x10] sm:$0xff pattern:$0x73625140]
      %v400 = vld.sshfl [vmem:[#allocation1 + $0x18] sm:$0xff pattern:$0x73625140]
      %v401 = vld.sshfl [vmem:[#allocation1 + $0x20] sm:$0xff pattern:$0x73625140]
      %v415 = vsel %vm344, %v387, 0.0
      %v416 = vsel %vm344, %v388, 0.0
      %v417 = vadd.f32 %v415, %v416
      %v418 = vsel %vm344, %v389, 0.0
      %v419 = vadd.f32 %v417, %v418
      %v420 = vsel %vm344, %v390, 0.0
      %v421 = vadd.f32 %v419, %v420
      %v422 = vsel %vm344, %v391, 0.0
      %v423 = vadd.f32 %v421, %v422
      %v424 = vsel %vm344, %v392, 0.0
      %v425 = vadd.f32 %v423, %v424
      %v426 = vsel %vm344, %v393, 0.0
      %v427 = vadd.f32 %v425, %v426
      %v428 = vsel %vm344, %v394, 0.0
      %v429 = vadd.f32 %v427, %v428
      %v430 = vsel %vm344, %v397, 0.0
      %v431 = vadd.f32 %v429, %v430
      %v432 = vsel %vm344, %v398, 0.0
      %v433 = vadd.f32 %v431, %v432
      %v434 = vsel %vm344, %v399, 0.0
      %v435 = vadd.f32 %v433, %v434
      %v436 = vsel %vm344, %v400, 0.0
      %v437 = vadd.f32 %v435, %v436
      %v438 = vsel %vm344, %v401, 0.0
      %v439 = vadd.f32 %v437, %v438
      %440 = vadd.xlane.f32.xlu0 %v439
      %v441 = vpop.xlane.xlu0 %440
      %v442 = vadd.f32 %v375, %v441
      %443 = vst.msk [vmem:[#allocation3] sm:$0x3] %vm373, %v442
    $region29: #{tpu_custom_call.1} parent=1 // pred_fallthru
      _
    // Predicated region
    $region30: #{tpu_custom_call.1} parent=1 // pred_check
      %p444 = pneg %p53
    $region31: #{tpu_custom_call.1} parent=1 // pred_check_branch
      %446 = sbr.rel (%p444) target = $region33
    $region32: #{tpu_custom_call.1} parent=1 // pred_region
      %v447 = vld [vmem:[#allocation2] sm:$0x3]
      %vm448 = vcmask 1024
      %449 = vst.msk [vmem:[%s2] sm:$0x3] %vm448, %v447
      %v450 = vld [vmem:[#allocation3] sm:$0x3]
      %451 = vst.msk [vmem:[%s3] sm:$0x3] %vm448, %v450
    $region33: #{tpu_custom_call.1} parent=1 // pred_fallthru
      _
    // Predicated region
    $region34: #{tpu_custom_call.1} parent=1 // pred_check
      _
    $region35: #{tpu_custom_call.1} parent=1 // pred_check_branch
      %453 = sbr.rel (0) target = $region37
    $region36: #{tpu_custom_call.1} parent=1 // pred_region
      _
    $region37: #{tpu_custom_call.1} parent=1 // pred_fallthru
      _
    // Predicated region
    $region38: #{tpu_custom_call.1} parent=1 // pred_check
      _
    $region39: #{tpu_custom_call.1} parent=1 // pred_check_branch
      %455 = sbr.rel (0) target = $region41
    $region40: #{tpu_custom_call.1} parent=1 // pred_region
      _
    $region41: #{tpu_custom_call.1} parent=1 // pred_fallthru
      _
    // Predicated region
    $region42: #{tpu_custom_call.1} parent=1 // pred_check
      _
    $region43: #{tpu_custom_call.1} parent=1 // pred_check_branch
      %457 = sbr.rel (0) target = $region45
    $region44: #{tpu_custom_call.1} parent=1 // pred_region
      _
    $region45: #{tpu_custom_call.1} parent=1 // pred_fallthru
      _
    // Predicated region
    $region46: #{tpu_custom_call.1} parent=1 // pred_check
      _
    $region47: #{tpu_custom_call.1} parent=1 // pred_check_branch
      %459 = sbr.rel (0) target = $region49
    $region48: #{tpu_custom_call.1} parent=1 // pred_region
      _
    $region49: #{tpu_custom_call.1} parent=1 // pred_fallthru
      _
    %460 = vsyncpa [#allocation5], 1
    %461 = vsyncpa [#allocation7], 1

</llo_original>
